<compile_context>
chip_gen: v7x
topology: tpu7x:2x2x1
jax: 0.10.0
libtpu: 0.0.40
codegen_flags: <defaults>
</compile_context>

<pallas_src>
import jax
import jax.numpy as jnp
from jax.experimental import pallas as pl
from jax.experimental.pallas import tpu as pltpu

INPUT_DIM = 2
HIDDEN_DIM = 64
LATENT_DIM = 2
OUTPUT_DIM = 2

# ---------------- packed-slab layout (all row offsets are multiples of 8) -------------
PAD_LANES = 128      # lane width of every block
SUBLANES = 8         # padded batch / replicated-bias rows
ROWS_W = 128         # rows per padded MXU weight block
ROWS_V = 8           # rows per sublane-replicated row-vector block (biases, K=2 rows)

# lane positions inside the (8, 128) data / output tiles
X_COL = 0            # x occupies lanes 0..1 of the data tile
EPS_COL = 2          # eps occupies lanes 2..3 of the data tile
DEC_COL = 0          # decoder output lanes 0..1 of the output tile
MEAN_COL = 2         # z_mean lanes 2..3 of the output tile
LOGVAR_COL = 4       # z_log_var lanes 4..5 of the output tile

R_W1E0 = 0                     # enc fc1 weight row 0 (replicated)     (8,128)
R_W1E1 = R_W1E0 + ROWS_V       # enc fc1 weight row 1 (replicated)     (8,128)
R_B1E = R_W1E1 + ROWS_V        # enc fc1 bias (replicated)             (8,128)
R_WMV = R_B1E + ROWS_V         # fused mean|logvar weight              (128,128)
R_BMV = R_WMV + ROWS_W         # fused mean|logvar bias (replicated)   (8,128)
R_W1D0 = R_BMV + ROWS_V        # dec fc1 weight row 0 (replicated)     (8,128)
R_W1D1 = R_W1D0 + ROWS_V       # dec fc1 weight row 1 (replicated)     (8,128)
R_B1D = R_W1D1 + ROWS_V        # dec fc1 bias (replicated)             (8,128)
R_W2D = R_B1D + ROWS_V         # dec fc2 weight                        (128,128)
R_B2D = R_W2D + ROWS_W
R_W3D = R_B2D + ROWS_V
R_B3D = R_W3D + ROWS_W
R_W4D = R_B3D + ROWS_V
R_B4D = R_W4D + ROWS_W
R_WO = R_B4D + ROWS_V          # dec output head weight                (128,128)
R_BO = R_WO + ROWS_W
SLAB_ROWS = R_BO + ROWS_V      # = 728


# ------------------------------------ kernel ------------------------------------------
def _vae_kernel(data_ref, slab_ref, out_ref):
    data = data_ref[...]                                    # (8, 128) lane-dense tile

    def w_mat(row):                                         # padded (128,128) MXU weight
        return slab_ref[pl.ds(row, ROWS_W), :]

    def w_vec(row):                                         # sublane-replicated (8,128) row
        return slab_ref[pl.ds(row, ROWS_V), :]

    # ---- Encoder fc1 (in_features = 2): VPU broadcast-FMA, skips one MXU round-trip.
    x0 = data[:, X_COL:X_COL + 1]                           # (8, 1)
    x1 = data[:, X_COL + 1:X_COL + 2]
    h = jnp.maximum(x0 * w_vec(R_W1E0) + x1 * w_vec(R_W1E1) + w_vec(R_B1E), 0.0)

    # ---- Fused mean | log_var projection: single MXU matmul.
    #      Result lanes 2..3 = z_mean, lanes 4..5 = z_log_var, all other lanes = 0.
    z_mv = jnp.dot(h, w_mat(R_WMV), preferred_element_type=jnp.float32) + w_vec(R_BMV)

    # ---- Reparameterize on the two live latent lanes: z = mean + exp(0.5*log_var)*eps.
    z0 = z_mv[:, MEAN_COL:MEAN_COL + 1] + \
        jnp.exp(0.5 * z_mv[:, LOGVAR_COL:LOGVAR_COL + 1]) * data[:, EPS_COL:EPS_COL + 1]
    z1 = z_mv[:, MEAN_COL + 1:MEAN_COL + 2] + \
        jnp.exp(0.5 * z_mv[:, LOGVAR_COL + 1:LOGVAR_COL + 2]) * data[:, EPS_COL + 1:EPS_COL + 2]

    # ---- Decoder fc1 (in_features = 2): VPU broadcast-FMA.
    h = jnp.maximum(z0 * w_vec(R_W1D0) + z1 * w_vec(R_W1D1) + w_vec(R_B1D), 0.0)
    # ---- Decoder fc2..fc4 (64 -> 64) on the MXU (weights zero-padded to 128x128).
    h = jnp.maximum(jnp.dot(h, w_mat(R_W2D), preferred_element_type=jnp.float32) + w_vec(R_B2D), 0.0)
    h = jnp.maximum(jnp.dot(h, w_mat(R_W3D), preferred_element_type=jnp.float32) + w_vec(R_B3D), 0.0)
    h = jnp.maximum(jnp.dot(h, w_mat(R_W4D), preferred_element_type=jnp.float32) + w_vec(R_B4D), 0.0)
    # ---- Decoder output head: lanes 0..1 hold the reconstruction, lanes >= 2 are 0.
    dec = jnp.dot(h, w_mat(R_WO), preferred_element_type=jnp.float32) + w_vec(R_BO)

    # Single unmasked lane-dense store:
    #   lanes 0..1 = decoder output, 2..3 = z_mean, 4..5 = z_log_var (z_mv is 0 on 0..1,
    #   dec is 0 on lanes >= 2, so a plain add merges them).
    out_ref[...] = dec + z_mv


# --------------------------------- parameter packing ----------------------------------
def _init_linear(key, in_dim, out_dim):
    """PyTorch-style nn.Linear default init, weight stored as (in, out)."""
    k_w, k_b = jax.random.split(key)
    bound = 1.0 / jnp.sqrt(jnp.float32(in_dim))
    w = jax.random.uniform(k_w, (in_dim, out_dim), jnp.float32, -bound, bound)
    b = jax.random.uniform(k_b, (1, out_dim), jnp.float32, -bound, bound)
    return w, b


def init_vae_params(key):
    keys = jax.random.split(key, 8)
    params = {}
    params["enc_fc1"] = _init_linear(keys[0], INPUT_DIM, HIDDEN_DIM)
    params["enc_mean"] = _init_linear(keys[1], HIDDEN_DIM, LATENT_DIM)
    params["enc_logvar"] = _init_linear(keys[2], HIDDEN_DIM, LATENT_DIM)
    params["dec_fc1"] = _init_linear(keys[3], LATENT_DIM, HIDDEN_DIM)
    params["dec_fc2"] = _init_linear(keys[4], HIDDEN_DIM, HIDDEN_DIM)
    params["dec_fc3"] = _init_linear(keys[5], HIDDEN_DIM, HIDDEN_DIM)
    params["dec_fc4"] = _init_linear(keys[6], HIDDEN_DIM, HIDDEN_DIM)
    params["dec_out"] = _init_linear(keys[7], HIDDEN_DIM, OUTPUT_DIM)
    return params


def pack_params(params):
    """Pack every weight/bias into one (SLAB_ROWS, 128) f32 slab (done once)."""
    blocks = []

    def add_vec(v, col_off=0):
        v = jnp.reshape(jnp.asarray(v, jnp.float32), (1, -1))
        blk = jnp.zeros((ROWS_V, PAD_LANES), jnp.float32)
        blocks.append(blk.at[:, col_off:col_off + v.shape[1]].set(
            jnp.broadcast_to(v, (ROWS_V, v.shape[1]))))

    def add_mat(m, col_off=0):
        m = jnp.asarray(m, jnp.float32)
        blk = jnp.zeros((ROWS_W, PAD_LANES), jnp.float32)
        blocks.append(blk.at[:m.shape[0], col_off:col_off + m.shape[1]].set(m))

    w1e, b1e = params["enc_fc1"]
    wm, bm = params["enc_mean"]
    wv, bv = params["enc_logvar"]
    w1d, b1d = params["dec_fc1"]
    w2d, b2d = params["dec_fc2"]
    w3d, b3d = params["dec_fc3"]
    w4d, b4d = params["dec_fc4"]
    wo, bo = params["dec_out"]

    add_vec(w1e[0]); add_vec(w1e[1]); add_vec(b1e)                      # R_W1E0/1, R_B1E
    add_mat(jnp.concatenate([wm, wv], axis=1), col_off=MEAN_COL)        # R_WMV (mean|logvar)
    add_vec(jnp.concatenate([jnp.reshape(bm, (1, -1)),
                             jnp.reshape(bv, (1, -1))], axis=1),
            col_off=MEAN_COL)                                           # R_BMV
    add_vec(w1d[0]); add_vec(w1d[1]); add_vec(b1d)                      # R_W1D0/1, R_B1D
    add_mat(w2d); add_vec(b2d)                                          # R_W2D, R_B2D
    add_mat(w3d); add_vec(b3d)                                          # R_W3D, R_B3D
    add_mat(w4d); add_vec(b4d)                                          # R_W4D, R_B4D
    add_mat(wo); add_vec(bo)                                            # R_WO,  R_BO

    slab = jnp.concatenate(blocks, axis=0)
    assert slab.shape == (SLAB_ROWS, PAD_LANES)
    return slab


# ------------------------------------- wrapper -----------------------------------------
def vae_forward(x, eps, slab):
    """Full VAE forward pass in one Pallas kernel.

    x:    (2, INPUT_DIM) float32
    eps:  (2, LATENT_DIM) float32 (the randn_like sample, passed in for determinism)
    slab: (SLAB_ROWS, 128) packed parameters from pack_params().
    Returns (x_reconstructed_mean, x_reconstructed_log_var, z_mean, z_log_var),
    matching the PyTorch module (decoder output tuple-unpacked along dim 0).
    """
    B = x.shape[0]
    assert B == 2, "PyTorch forward unpacks decoder output along dim 0 -> needs B == 2"

    # One lane-dense input tile: x at lanes 0..1, eps at lanes 2..3, batch padded to 8.
    data = jnp.zeros((SUBLANES, PAD_LANES), jnp.float32)
    data = data.at[:B, X_COL:X_COL + INPUT_DIM].set(x.astype(jnp.float32))
    data = data.at[:B, EPS_COL:EPS_COL + LATENT_DIM].set(eps.astype(jnp.float32))

    vmem = pl.BlockSpec(memory_space=pltpu.MemorySpace.VMEM)
    out = pl.pallas_call(
        _vae_kernel,
        out_shape=jax.ShapeDtypeStruct((SUBLANES, PAD_LANES), jnp.float32),
        in_specs=[vmem, vmem],
        out_specs=vmem,
        cost_estimate=pl.CostEstimate(
            flops=2 * SUBLANES * PAD_LANES * PAD_LANES * 5,        # 5 padded MXU matmuls
            transcendentals=2 * SUBLANES,                          # exp on the latent lanes
            bytes_accessed=(SLAB_ROWS + 2 * SUBLANES) * PAD_LANES * 4,
        ),
    )(data, slab)

    dec = out[:B, DEC_COL:DEC_COL + OUTPUT_DIM]                    # (2, 2)
    z_mean = out[:B, MEAN_COL:MEAN_COL + LATENT_DIM]               # (2, 2)
    z_log_var = out[:B, LOGVAR_COL:LOGVAR_COL + LATENT_DIM]        # (2, 2)

    # Mirror PyTorch's `a, b = decoder(z)` tuple unpacking along dim 0.
    x_reconstructed_mean = dec[0]
    x_reconstructed_log_var = dec[1]
    return x_reconstructed_mean, x_reconstructed_log_var, z_mean, z_log_var


if __name__ == "__main__":
    key = jax.random.PRNGKey(0)
    k_params, k_x, k_eps = jax.random.split(key, 3)

    B = 2  # must be 2 to match the PyTorch tuple-unpacking semantics
    params = init_vae_params(k_params)
    slab = pack_params(params)          # packed once; reused across forward calls
    x = jax.random.normal(k_x, (B, INPUT_DIM), jnp.float32)
    eps = jax.random.normal(k_eps, (B, LATENT_DIM), jnp.float32)

    fwd = jax.jit(vae_forward)
    outs = fwd(x, eps, slab)
    outs = jax.block_until_ready(outs)

    x_rec_mean, x_rec_log_var, z_mean, z_log_var = outs
    assert x_rec_mean.shape == (OUTPUT_DIM,)
    assert x_rec_log_var.shape == (OUTPUT_DIM,)
    assert z_mean.shape == (B, LATENT_DIM)
    assert z_log_var.shape == (B, LATENT_DIM)

    print("KERNEL_OK")
</pallas_src>

<mosaic_0001>
module attributes {stable_mosaic.version = 11 : i64} {
  func.func @_vae_kernel(%arg0: memref<8x128xf32, #tpu.memory_space<vmem>>, %arg1: memref<728x128xf32, #tpu.memory_space<vmem>>, %arg2: memref<8x128xf32, #tpu.memory_space<vmem>>) attributes {dimension_semantics = [], scalar_prefetch = 0 : i64, scratch_operands = 0 : i64, tpu.core_type = #tpu.core_type<tc>} {
    %c0 = arith.constant 0 : index
    %c0_0 = arith.constant 0 : index
    %0 = vector.load %arg0[%c0, %c0_0] : memref<8x128xf32, #tpu.memory_space<vmem>>, vector<8x128xf32>
    %1 = vector.extract_strided_slice %0 {offsets = [0, 0], sizes = [8, 1], strides = [1, 1]} : vector<8x128xf32> to vector<8x1xf32>
    %2 = vector.extract_strided_slice %0 {offsets = [0, 1], sizes = [8, 1], strides = [1, 1]} : vector<8x128xf32> to vector<8x1xf32>
    %c0_1 = arith.constant 0 : index
    %c0_2 = arith.constant 0 : index
    %3 = vector.load %arg1[%c0_1, %c0_2] : memref<728x128xf32, #tpu.memory_space<vmem>>, vector<8x128xf32>
    %4 = vector.broadcast %1 : vector<8x1xf32> to vector<8x128xf32>
    %5 = arith.mulf %4, %3 : vector<8x128xf32>
    %c8 = arith.constant 8 : index
    %c0_3 = arith.constant 0 : index
    %6 = vector.load %arg1[%c8, %c0_3] : memref<728x128xf32, #tpu.memory_space<vmem>>, vector<8x128xf32>
    %7 = vector.broadcast %2 : vector<8x1xf32> to vector<8x128xf32>
    %8 = arith.mulf %7, %6 : vector<8x128xf32>
    %9 = arith.addf %5, %8 : vector<8x128xf32>
    %c16 = arith.constant 16 : index
    %c0_4 = arith.constant 0 : index
    %10 = vector.load %arg1[%c16, %c0_4] : memref<728x128xf32, #tpu.memory_space<vmem>>, vector<8x128xf32>
    %11 = arith.addf %9, %10 : vector<8x128xf32>
    %cst = arith.constant 0.000000e+00 : f32
    %12 = vector.broadcast %cst : f32 to vector<8x128xf32>
    %13 = arith.maximumf %11, %12 : vector<8x128xf32>
    %c24 = arith.constant 24 : index
    %c0_5 = arith.constant 0 : index
    %14 = vector.load %arg1[%c24, %c0_5] : memref<728x128xf32, #tpu.memory_space<vmem>>, vector<128x128xf32>
    %cst_6 = arith.constant dense<0.000000e+00> : vector<8x128xf32>
    %15 = tpu.matmul %13, %14, %cst_6 {dimension_numbers = #tpu.dot_dimension_numbers<[1], [0], [0], [1], [0, 0, 1, 1], [], []>} : vector<8x128xf32>, vector<128x128xf32>, vector<8x128xf32> -> vector<8x128xf32>
    %c152 = arith.constant 152 : index
    %c0_7 = arith.constant 0 : index
    %16 = vector.load %arg1[%c152, %c0_7] : memref<728x128xf32, #tpu.memory_space<vmem>>, vector<8x128xf32>
    %17 = arith.addf %15, %16 : vector<8x128xf32>
    %18 = vector.extract_strided_slice %17 {offsets = [0, 2], sizes = [8, 1], strides = [1, 1]} : vector<8x128xf32> to vector<8x1xf32>
    %19 = vector.extract_strided_slice %17 {offsets = [0, 4], sizes = [8, 1], strides = [1, 1]} : vector<8x128xf32> to vector<8x1xf32>
    %cst_8 = arith.constant 5.000000e-01 : f32
    %20 = vector.broadcast %cst_8 : f32 to vector<8x1xf32>
    %21 = arith.mulf %20, %19 : vector<8x1xf32>
    %22 = math.exp %21 : vector<8x1xf32>
    %23 = vector.extract_strided_slice %0 {offsets = [0, 2], sizes = [8, 1], strides = [1, 1]} : vector<8x128xf32> to vector<8x1xf32>
    %24 = arith.mulf %22, %23 : vector<8x1xf32>
    %25 = arith.addf %18, %24 : vector<8x1xf32>
    %26 = vector.extract_strided_slice %17 {offsets = [0, 3], sizes = [8, 1], strides = [1, 1]} : vector<8x128xf32> to vector<8x1xf32>
    %27 = vector.extract_strided_slice %17 {offsets = [0, 5], sizes = [8, 1], strides = [1, 1]} : vector<8x128xf32> to vector<8x1xf32>
    %cst_9 = arith.constant 5.000000e-01 : f32
    %28 = vector.broadcast %cst_9 : f32 to vector<8x1xf32>
    %29 = arith.mulf %28, %27 : vector<8x1xf32>
    %30 = math.exp %29 : vector<8x1xf32>
    %31 = vector.extract_strided_slice %0 {offsets = [0, 3], sizes = [8, 1], strides = [1, 1]} : vector<8x128xf32> to vector<8x1xf32>
    %32 = arith.mulf %30, %31 : vector<8x1xf32>
    %33 = arith.addf %26, %32 : vector<8x1xf32>
    %c160 = arith.constant 160 : index
    %c0_10 = arith.constant 0 : index
    %34 = vector.load %arg1[%c160, %c0_10] : memref<728x128xf32, #tpu.memory_space<vmem>>, vector<8x128xf32>
    %35 = vector.broadcast %25 : vector<8x1xf32> to vector<8x128xf32>
    %36 = arith.mulf %35, %34 : vector<8x128xf32>
    %c168 = arith.constant 168 : index
    %c0_11 = arith.constant 0 : index
    %37 = vector.load %arg1[%c168, %c0_11] : memref<728x128xf32, #tpu.memory_space<vmem>>, vector<8x128xf32>
    %38 = vector.broadcast %33 : vector<8x1xf32> to vector<8x128xf32>
    %39 = arith.mulf %38, %37 : vector<8x128xf32>
    %40 = arith.addf %36, %39 : vector<8x128xf32>
    %c176 = arith.constant 176 : index
    %c0_12 = arith.constant 0 : index
    %41 = vector.load %arg1[%c176, %c0_12] : memref<728x128xf32, #tpu.memory_space<vmem>>, vector<8x128xf32>
    %42 = arith.addf %40, %41 : vector<8x128xf32>
    %cst_13 = arith.constant 0.000000e+00 : f32
    %43 = vector.broadcast %cst_13 : f32 to vector<8x128xf32>
    %44 = arith.maximumf %42, %43 : vector<8x128xf32>
    %c184 = arith.constant 184 : index
    %c0_14 = arith.constant 0 : index
    %45 = vector.load %arg1[%c184, %c0_14] : memref<728x128xf32, #tpu.memory_space<vmem>>, vector<128x128xf32>
    %cst_15 = arith.constant dense<0.000000e+00> : vector<8x128xf32>
    %46 = tpu.matmul %44, %45, %cst_15 {dimension_numbers = #tpu.dot_dimension_numbers<[1], [0], [0], [1], [0, 0, 1, 1], [], []>} : vector<8x128xf32>, vector<128x128xf32>, vector<8x128xf32> -> vector<8x128xf32>
    %c312 = arith.constant 312 : index
    %c0_16 = arith.constant 0 : index
    %47 = vector.load %arg1[%c312, %c0_16] : memref<728x128xf32, #tpu.memory_space<vmem>>, vector<8x128xf32>
    %48 = arith.addf %46, %47 : vector<8x128xf32>
    %cst_17 = arith.constant 0.000000e+00 : f32
    %49 = vector.broadcast %cst_17 : f32 to vector<8x128xf32>
    %50 = arith.maximumf %48, %49 : vector<8x128xf32>
    %c320 = arith.constant 320 : index
    %c0_18 = arith.constant 0 : index
    %51 = vector.load %arg1[%c320, %c0_18] : memref<728x128xf32, #tpu.memory_space<vmem>>, vector<128x128xf32>
    %cst_19 = arith.constant dense<0.000000e+00> : vector<8x128xf32>
    %52 = tpu.matmul %50, %51, %cst_19 {dimension_numbers = #tpu.dot_dimension_numbers<[1], [0], [0], [1], [0, 0, 1, 1], [], []>} : vector<8x128xf32>, vector<128x128xf32>, vector<8x128xf32> -> vector<8x128xf32>
    %c448 = arith.constant 448 : index
    %c0_20 = arith.constant 0 : index
    %53 = vector.load %arg1[%c448, %c0_20] : memref<728x128xf32, #tpu.memory_space<vmem>>, vector<8x128xf32>
    %54 = arith.addf %52, %53 : vector<8x128xf32>
    %cst_21 = arith.constant 0.000000e+00 : f32
    %55 = vector.broadcast %cst_21 : f32 to vector<8x128xf32>
    %56 = arith.maximumf %54, %55 : vector<8x128xf32>
    %c456 = arith.constant 456 : index
    %c0_22 = arith.constant 0 : index
    %57 = vector.load %arg1[%c456, %c0_22] : memref<728x128xf32, #tpu.memory_space<vmem>>, vector<128x128xf32>
    %cst_23 = arith.constant dense<0.000000e+00> : vector<8x128xf32>
    %58 = tpu.matmul %56, %57, %cst_23 {dimension_numbers = #tpu.dot_dimension_numbers<[1], [0], [0], [1], [0, 0, 1, 1], [], []>} : vector<8x128xf32>, vector<128x128xf32>, vector<8x128xf32> -> vector<8x128xf32>
    %c584 = arith.constant 584 : index
    %c0_24 = arith.constant 0 : index
    %59 = vector.load %arg1[%c584, %c0_24] : memref<728x128xf32, #tpu.memory_space<vmem>>, vector<8x128xf32>
    %60 = arith.addf %58, %59 : vector<8x128xf32>
    %cst_25 = arith.constant 0.000000e+00 : f32
    %61 = vector.broadcast %cst_25 : f32 to vector<8x128xf32>
    %62 = arith.maximumf %60, %61 : vector<8x128xf32>
    %c592 = arith.constant 592 : index
    %c0_26 = arith.constant 0 : index
    %63 = vector.load %arg1[%c592, %c0_26] : memref<728x128xf32, #tpu.memory_space<vmem>>, vector<128x128xf32>
    %cst_27 = arith.constant dense<0.000000e+00> : vector<8x128xf32>
    %64 = tpu.matmul %62, %63, %cst_27 {dimension_numbers = #tpu.dot_dimension_numbers<[1], [0], [0], [1], [0, 0, 1, 1], [], []>} : vector<8x128xf32>, vector<128x128xf32>, vector<8x128xf32> -> vector<8x128xf32>
    %c720 = arith.constant 720 : index
    %c0_28 = arith.constant 0 : index
    %65 = vector.load %arg1[%c720, %c0_28] : memref<728x128xf32, #tpu.memory_space<vmem>>, vector<8x128xf32>
    %66 = arith.addf %64, %65 : vector<8x128xf32>
    %67 = arith.addf %66, %17 : vector<8x128xf32>
    %c0_29 = arith.constant 0 : index
    %c0_30 = arith.constant 0 : index
    %68 = vector.load %arg2[%c0_29, %c0_30] : memref<8x128xf32, #tpu.memory_space<vmem>>, vector<8x128xf32>
    tpu.vector_store %arg2[%c0_29, %c0_30], %67 {strides = array<i32>} : memref<8x128xf32, #tpu.memory_space<vmem>>, vector<8x128xf32>,
    return
  }
}

</mosaic_0001>

<llo_original>
// kernel: vae_forward.1
$region0: #{vae_forward.1}
  #allocation0 [shape = 'u32[]', space=smem, size = 0x4, offset = 0x4, fixed_abs, tag = 'smem constant byte address 0x4 - core index']
  #allocation1 [shape = 'u32[144,128]{1,0:T(1,128)}', space=vmem, size = 0x12000, scoped, tag = 'internal scratch']
  %s0 = inlined_call_operand.vmem [shape: f32[8,128], index: 0, kind: input, shape index: {}]
  %s1 = inlined_call_operand.hbm [shape: f32[728,128], index: 1, kind: input, shape index: {}]
  %s2 = inlined_call_operand.vmem [shape: f32[8,128], index: 2, kind: output, shape index: {}]
  %s3 = sld [smem:[#allocation0]]
  $region22: #{vae_forward.1} parent=0
    _
  %s5 = ssub.s32 1, %s3
  %s6 = scalar_select 0, %s5, %s3
  $region1: #{vae_forward.1} parent=0
    #allocation2 [shape = 'u8[372736]{0}', space=vmem, size = 0x5b000, scoped, tag = 'input window, operand 1, single buffered']
    #allocation3 [shape = 's32[1]{0}', space=sflag, size = 0x4, scoped, tag = 'scoped memory for vae_forward.1']
    %7 = vsyncpa [#allocation3], 0
    // Predicated region
    $region2: #{vae_forward.1} parent=1 // pred_check
      _
    $region3: #{vae_forward.1} parent=1 // pred_check_branch
      %9 = sbr.rel (0) target = $region5
    $region4: #{vae_forward.1} parent=1 // pred_region
      _
    $region5: #{vae_forward.1} parent=1 // pred_fallthru
      _
    // Predicated region
    $region6: #{vae_forward.1} parent=1 // pred_check
      _
    $region7: #{vae_forward.1} parent=1 // pred_check_branch
      %11 = sbr.rel (0) target = $region9
    $region8: #{vae_forward.1} parent=1 // pred_region
      %s13 = ssub.s32 11648, 11648
      %14 = vsyncadd [#allocation3], %s13
      %s15 = sshll.u32 [#allocation2], 4
      %s16 = int_to_ptr.vmem [resolvable:$true] %s15
      %21 = dma.hbm_to_vmem [thread:$0]  %s1, 11648, %s16, [#allocation3], 128, 128, 8
    $region9: #{vae_forward.1} parent=1 // pred_fallthru
      _
    // Predicated region
    $region10: #{vae_forward.1} parent=1 // pred_check
      _
    $region11: #{vae_forward.1} parent=1 // pred_check_branch
      %23 = sbr.rel (0) target = $region13
    $region12: #{vae_forward.1} parent=1 // pred_region
      %24 = dma.done [#allocation3], 11648
    $region13: #{vae_forward.1} parent=1 // pred_fallthru
      _
    %v25 = vld [vmem:[%s0] sm:$0xff]
    %v26 = vld [vmem:[#allocation2] sm:$0xff]
    %28 = vset.pattern.permute.xlu0 0
    %29 = vperm.xlu0 %28, %v25
    %v30 = vpop.permute.xlu0 %29
    %v32 = vmul.f32 %v30, %v26
    %v33 = vld [vmem:[#allocation2 + $0x8] sm:$0xff]
    %34 = vset.pattern.permute.xlu0 1
    %35 = vperm.xlu0 %34, %v25
    %v36 = vpop.permute.xlu0 %35
    %v38 = vmul.f32 %v36, %v33
    %v39 = vadd.f32 %v32, %v38
    %v40 = vld [vmem:[#allocation2 + $0x10] sm:$0xff]
    %v41 = vadd.f32 %v39, %v40
    %v42 = vmax.f32 %v41, 0.0
    %v43 = vld [vmem:[#allocation2 + $0x18] sm:$0xff]
    %v44 = vld [vmem:[#allocation2 + $0x20] sm:$0xff]
    %v45 = vld [vmem:[#allocation2 + $0x28] sm:$0xff]
    %v46 = vld [vmem:[#allocation2 + $0x30] sm:$0xff]
    %v47 = vld [vmem:[#allocation2 + $0x38] sm:$0xff]
    %v48 = vld [vmem:[#allocation2 + $0x40] sm:$0xff]
    %v49 = vld [vmem:[#allocation2 + $0x48] sm:$0xff]
    %v50 = vld [vmem:[#allocation2 + $0x50] sm:$0xff]
    %v51 = vld [vmem:[#allocation2 + $0x58] sm:$0xff]
    %v52 = vld [vmem:[#allocation2 + $0x60] sm:$0xff]
    %v53 = vld [vmem:[#allocation2 + $0x68] sm:$0xff]
    %v54 = vld [vmem:[#allocation2 + $0x70] sm:$0xff]
    %v55 = vld [vmem:[#allocation2 + $0x78] sm:$0xff]
    %v56 = vld [vmem:[#allocation2 + $0x80] sm:$0xff]
    %v57 = vld [vmem:[#allocation2 + $0x88] sm:$0xff]
    %v58 = vld [vmem:[#allocation2 + $0x90] sm:$0xff]
    %v59 = vld [vmem:[#allocation2 + $0x98] sm:$0xff]
    %60 = vmatprep.subr.mxu0 0.0
    %61 = vmatpush1.msra.mxu0 %v43
    %62 = vmatprep.subr.mxu0 0.0
    %63 = vmatpush1.msra.mxu0 %v44
    %64 = vmatprep.subr.mxu0 0.0
    %65 = vmatpush1.msra.mxu0 %v45
    %66 = vmatprep.subr.mxu0 0.0
    %67 = vmatpush1.msra.mxu0 %v46
    %68 = vmatprep.subr.mxu0 0.0
    %69 = vmatpush1.msra.mxu0 %v47
    %70 = vmatprep.subr.mxu0 0.0
    %71 = vmatpush1.msra.mxu0 %v48
    %72 = vmatprep.subr.mxu0 0.0
    %73 = vmatpush1.msra.mxu0 %v49
    %74 = vmatprep.subr.mxu0 0.0
    %75 = vmatpush1.msra.mxu0 %v50
    %76 = vmatprep.subr.mxu0 0.0
    %77 = vmatpush1.msra.mxu0 %v51
    %78 = vmatprep.subr.mxu0 0.0
    %79 = vmatpush1.msra.mxu0 %v52
    %80 = vmatprep.subr.mxu0 0.0
    %81 = vmatpush1.msra.mxu0 %v53
    %82 = vmatprep.subr.mxu0 0.0
    %83 = vmatpush1.msra.mxu0 %v54
    %84 = vmatprep.subr.mxu0 0.0
    %85 = vmatpush1.msra.mxu0 %v55
    %86 = vmatprep.subr.mxu0 0.0
    %87 = vmatpush1.msra.mxu0 %v56
    %88 = vmatprep.subr.mxu0 0.0
    %89 = vmatpush1.msra.mxu0 %v57
    %90 = vmatprep.subr.mxu0 0.0
    %91 = vmatpush1.msra.mxu0 %v58
    %92 = vmatprep.subr.mxu0 0.0
    %93 = vmatpush1.msra.mxu0 0.0
    %94 = vmatprep.subr.mxu0 0.0
    %95 = vmatpush1.msra.mxu0 0.0
    %96 = vmatprep.subr.mxu0 0.0
    %97 = vmatpush1.msra.mxu0 0.0
    %98 = vmatprep.subr.mxu0 0.0
    %99 = vmatpush1.msra.mxu0 0.0
    %100 = vmatprep.subr.mxu0 0.0
    %101 = vmatpush1.msra.mxu0 0.0
    %102 = vmatprep.subr.mxu0 0.0
    %103 = vmatpush1.msra.mxu0 0.0
    %104 = vmatprep.subr.mxu0 0.0
    %105 = vmatpush1.msra.mxu0 0.0
    %106 = vmatprep.subr.mxu0 0.0
    %107 = vmatpush1.msra.mxu0 0.0
    %108 = vmatprep.subr.mxu0 0.0
    %109 = vmatpush1.msra.mxu0 0.0
    %110 = vmatprep.subr.mxu0 0.0
    %111 = vmatpush1.msra.mxu0 0.0
    %112 = vmatprep.subr.mxu0 0.0
    %113 = vmatpush1.msra.mxu0 0.0
    %114 = vmatprep.subr.mxu0 0.0
    %115 = vmatpush1.msra.mxu0 0.0
    %116 = vmatprep.subr.mxu0 0.0
    %117 = vmatpush1.msra.mxu0 0.0
    %118 = vmatprep.subr.mxu0 0.0
    %119 = vmatpush1.msra.mxu0 0.0
    %120 = vmatprep.subr.mxu0 0.0
    %121 = vmatpush1.msra.mxu0 0.0
    %122 = vmatprep.subr.mxu0 0.0
    %123 = vmatpush1.msra.mxu0 0.0
    %124 = vmatprep.mubr.f32.mxu0 0.0
    %125 = vmatmul.mubr.f32.gmra.mrb[0].mxu0 %v42
    %v126 = vpop.f32.mrb[0].mxu0
    %v127 = vadd.f32 %v59, %v126
    %v128 = vpop.f32.mrb[0].mxu0
    %129 = vdwg.mxu0
    %v130 = vmul.f32 %v127, 0.5
    %v131 = vmul.f32 %v130, 1.442695
    %v132 = vpow.pop %v131
    %133 = vrot.lane.b32.xlu0 %v25, 2
    %v134 = vpop.permute.xlu0 %133
    %v136 = vmul.f32 %v132, %v134
    %138 = vrot.lane.b32.xlu0 %v136, 126
    %v139 = vpop.permute.xlu0 %138
    %v141 = vadd.f32 %v127, %v139
    %v142 = vld [vmem:[#allocation2 + $0xa0] sm:$0xff]
    %144 = vset.pattern.permute.xlu0 2
    %145 = vperm.xlu0 %144, %v141
    %v146 = vpop.permute.xlu0 %145
    %v148 = vmul.f32 %v146, %v142
    %v149 = vld [vmem:[#allocation2 + $0xa8] sm:$0xff]
    %150 = vset.pattern.permute.xlu0 3
    %151 = vperm.xlu0 %150, %v141
    %v152 = vpop.permute.xlu0 %151
    %v154 = vmul.f32 %v152, %v149
    %v155 = vadd.f32 %v148, %v154
    %v156 = vld [vmem:[#allocation2 + $0xb0] sm:$0xff]
    %v157 = vadd.f32 %v155, %v156
    %v158 = vmax.f32 %v157, 0.0
    %v159 = vld [vmem:[#allocation2 + $0xb8] sm:$0xff]
    %v160 = vld [vmem:[#allocation2 + $0xc0] sm:$0xff]
    %v161 = vld [vmem:[#allocation2 + $0xc8] sm:$0xff]
    %v162 = vld [vmem:[#allocation2 + $0xd0] sm:$0xff]
    %v163 = vld [vmem:[#allocation2 + $0xd8] sm:$0xff]
    %v164 = vld [vmem:[#allocation2 + $0xe0] sm:$0xff]
    %v165 = vld [vmem:[#allocation2 + $0xe8] sm:$0xff]
    %v166 = vld [vmem:[#allocation2 + $0xf0] sm:$0xff]
    %v167 = vld [vmem:[#allocation2 + $0xf8] sm:$0xff]
    %v168 = vld [vmem:[#allocation2 + $0x100] sm:$0xff]
    %v169 = vld [vmem:[#allocation2 + $0x108] sm:$0xff]
    %v170 = vld [vmem:[#allocation2 + $0x110] sm:$0xff]
    %v171 = vld [vmem:[#allocation2 + $0x118] sm:$0xff]
    %v172 = vld [vmem:[#allocation2 + $0x120] sm:$0xff]
    %v173 = vld [vmem:[#allocation2 + $0x128] sm:$0xff]
    %v174 = vld [vmem:[#allocation2 + $0x130] sm:$0xff]
    %v175 = vld [vmem:[#allocation2 + $0x138] sm:$0xff]
    %176 = vmatprep.subr.mxu0 0.0
    %177 = vmatpush1.msra.mxu0 %v159
    %178 = vmatprep.subr.mxu0 0.0
    %179 = vmatpush1.msra.mxu0 %v160
    %180 = vmatprep.subr.mxu0 0.0
    %181 = vmatpush1.msra.mxu0 %v161
    %182 = vmatprep.subr.mxu0 0.0
    %183 = vmatpush1.msra.mxu0 %v162
    %184 = vmatprep.subr.mxu0 0.0
    %185 = vmatpush1.msra.mxu0 %v163
    %186 = vmatprep.subr.mxu0 0.0
    %187 = vmatpush1.msra.mxu0 %v164
    %188 = vmatprep.subr.mxu0 0.0
    %189 = vmatpush1.msra.mxu0 %v165
    %190 = vmatprep.subr.mxu0 0.0
    %191 = vmatpush1.msra.mxu0 %v166
    %192 = vmatprep.subr.mxu0 0.0
    %193 = vmatpush1.msra.mxu0 %v167
    %194 = vmatprep.subr.mxu0 0.0
    %195 = vmatpush1.msra.mxu0 %v168
    %196 = vmatprep.subr.mxu0 0.0
    %197 = vmatpush1.msra.mxu0 %v169
    %198 = vmatprep.subr.mxu0 0.0
    %199 = vmatpush1.msra.mxu0 %v170
    %200 = vmatprep.subr.mxu0 0.0
    %201 = vmatpush1.msra.mxu0 %v171
    %202 = vmatprep.subr.mxu0 0.0
    %203 = vmatpush1.msra.mxu0 %v172
    %204 = vmatprep.subr.mxu0 0.0
    %205 = vmatpush1.msra.mxu0 %v173
    %206 = vmatprep.subr.mxu0 0.0
    %207 = vmatpush1.msra.mxu0 %v174
    %208 = vmatprep.subr.mxu0 0.0
    %209 = vmatpush1.msra.mxu0 0.0
    %210 = vmatprep.subr.mxu0 0.0
    %211 = vmatpush1.msra.mxu0 0.0
    %212 = vmatprep.subr.mxu0 0.0
    %213 = vmatpush1.msra.mxu0 0.0
    %214 = vmatprep.subr.mxu0 0.0
    %215 = vmatpush1.msra.mxu0 0.0
    %216 = vmatprep.subr.mxu0 0.0
    %217 = vmatpush1.msra.mxu0 0.0
    %218 = vmatprep.subr.mxu0 0.0
    %219 = vmatpush1.msra.mxu0 0.0
    %220 = vmatprep.subr.mxu0 0.0
    %221 = vmatpush1.msra.mxu0 0.0
    %222 = vmatprep.subr.mxu0 0.0
    %223 = vmatpush1.msra.mxu0 0.0
    %224 = vmatprep.subr.mxu0 0.0
    %225 = vmatpush1.msra.mxu0 0.0
    %226 = vmatprep.subr.mxu0 0.0
    %227 = vmatpush1.msra.mxu0 0.0
    %228 = vmatprep.subr.mxu0 0.0
    %229 = vmatpush1.msra.mxu0 0.0
    %230 = vmatprep.subr.mxu0 0.0
    %231 = vmatpush1.msra.mxu0 0.0
    %232 = vmatprep.subr.mxu0 0.0
    %233 = vmatpush1.msra.mxu0 0.0
    %234 = vmatprep.subr.mxu0 0.0
    %235 = vmatpush1.msra.mxu0 0.0
    %236 = vmatprep.subr.mxu0 0.0
    %237 = vmatpush1.msra.mxu0 0.0
    %238 = vmatprep.subr.mxu0 0.0
    %239 = vmatpush1.msra.mxu0 0.0
    %240 = vmatprep.mubr.f32.mxu0 0.0
    %241 = vmatmul.mubr.f32.gmra.mrb[0].mxu0 %v158
    %v242 = vpop.f32.mrb[0].mxu0
    %v243 = vadd.f32 %v175, %v242
    %v244 = vpop.f32.mrb[0].mxu0
    %245 = vdwg.mxu0
    %v246 = vmax.f32 %v243, 0.0
    %v247 = vld [vmem:[#allocation2 + $0x140] sm:$0xff]
    %v248 = vld [vmem:[#allocation2 + $0x148] sm:$0xff]
    %v249 = vld [vmem:[#allocation2 + $0x150] sm:$0xff]
    %v250 = vld [vmem:[#allocation2 + $0x158] sm:$0xff]
    %v251 = vld [vmem:[#allocation2 + $0x160] sm:$0xff]
    %v252 = vld [vmem:[#allocation2 + $0x168] sm:$0xff]
    %v253 = vld [vmem:[#allocation2 + $0x170] sm:$0xff]
    %v254 = vld [vmem:[#allocation2 + $0x178] sm:$0xff]
    %v255 = vld [vmem:[#allocation2 + $0x180] sm:$0xff]
    %v256 = vld [vmem:[#allocation2 + $0x188] sm:$0xff]
    %v257 = vld [vmem:[#allocation2 + $0x190] sm:$0xff]
    %v258 = vld [vmem:[#allocation2 + $0x198] sm:$0xff]
    %v259 = vld [vmem:[#allocation2 + $0x1a0] sm:$0xff]
    %v260 = vld [vmem:[#allocation2 + $0x1a8] sm:$0xff]
    %v261 = vld [vmem:[#allocation2 + $0x1b0] sm:$0xff]
    %v262 = vld [vmem:[#allocation2 + $0x1b8] sm:$0xff]
    %v263 = vld [vmem:[#allocation2 + $0x1c0] sm:$0xff]
    %264 = vmatprep.subr.mxu0 0.0
    %265 = vmatpush1.msra.mxu0 %v247
    %266 = vmatprep.subr.mxu0 0.0
    %267 = vmatpush1.msra.mxu0 %v248
    %268 = vmatprep.subr.mxu0 0.0
    %269 = vmatpush1.msra.mxu0 %v249
    %270 = vmatprep.subr.mxu0 0.0
    %271 = vmatpush1.msra.mxu0 %v250
    %272 = vmatprep.subr.mxu0 0.0
    %273 = vmatpush1.msra.mxu0 %v251
    %274 = vmatprep.subr.mxu0 0.0
    %275 = vmatpush1.msra.mxu0 %v252
    %276 = vmatprep.subr.mxu0 0.0
    %277 = vmatpush1.msra.mxu0 %v253
    %278 = vmatprep.subr.mxu0 0.0
    %279 = vmatpush1.msra.mxu0 %v254
    %280 = vmatprep.subr.mxu0 0.0
    %281 = vmatpush1.msra.mxu0 %v255
    %282 = vmatprep.subr.mxu0 0.0
    %283 = vmatpush1.msra.mxu0 %v256
    %284 = vmatprep.subr.mxu0 0.0
    %285 = vmatpush1.msra.mxu0 %v257
    %286 = vmatprep.subr.mxu0 0.0
    %287 = vmatpush1.msra.mxu0 %v258
    %288 = vmatprep.subr.mxu0 0.0
    %289 = vmatpush1.msra.mxu0 %v259
    %290 = vmatprep.subr.mxu0 0.0
    %291 = vmatpush1.msra.mxu0 %v260
    %292 = vmatprep.subr.mxu0 0.0
    %293 = vmatpush1.msra.mxu0 %v261
    %294 = vmatprep.subr.mxu0 0.0
    %295 = vmatpush1.msra.mxu0 %v262
    %296 = vmatprep.subr.mxu0 0.0
    %297 = vmatpush1.msra.mxu0 0.0
    %298 = vmatprep.subr.mxu0 0.0
    %299 = vmatpush1.msra.mxu0 0.0
    %300 = vmatprep.subr.mxu0 0.0
    %301 = vmatpush1.msra.mxu0 0.0
    %302 = vmatprep.subr.mxu0 0.0
    %303 = vmatpush1.msra.mxu0 0.0
    %304 = vmatprep.subr.mxu0 0.0
    %305 = vmatpush1.msra.mxu0 0.0
    %306 = vmatprep.subr.mxu0 0.0
    %307 = vmatpush1.msra.mxu0 0.0
    %308 = vmatprep.subr.mxu0 0.0
    %309 = vmatpush1.msra.mxu0 0.0
    %310 = vmatprep.subr.mxu0 0.0
    %311 = vmatpush1.msra.mxu0 0.0
    %312 = vmatprep.subr.mxu0 0.0
    %313 = vmatpush1.msra.mxu0 0.0
    %314 = vmatprep.subr.mxu0 0.0
    %315 = vmatpush1.msra.mxu0 0.0
    %316 = vmatprep.subr.mxu0 0.0
    %317 = vmatpush1.msra.mxu0 0.0
    %318 = vmatprep.subr.mxu0 0.0
    %319 = vmatpush1.msra.mxu0 0.0
    %320 = vmatprep.subr.mxu0 0.0
    %321 = vmatpush1.msra.mxu0 0.0
    %322 = vmatprep.subr.mxu0 0.0
    %323 = vmatpush1.msra.mxu0 0.0
    %324 = vmatprep.subr.mxu0 0.0
    %325 = vmatpush1.msra.mxu0 0.0
    %326 = vmatprep.subr.mxu0 0.0
    %327 = vmatpush1.msra.mxu0 0.0
    %328 = vmatprep.mubr.f32.mxu0 0.0
    %329 = vmatmul.mubr.f32.gmra.mrb[0].mxu0 %v246
    %v330 = vpop.f32.mrb[0].mxu0
    %v331 = vadd.f32 %v263, %v330
    %v332 = vpop.f32.mrb[0].mxu0
    %333 = vdwg.mxu0
    %v334 = vmax.f32 %v331, 0.0
    %v335 = vld [vmem:[#allocation2 + $0x1c8] sm:$0xff]
    %v336 = vld [vmem:[#allocation2 + $0x1d0] sm:$0xff]
    %v337 = vld [vmem:[#allocation2 + $0x1d8] sm:$0xff]
    %v338 = vld [vmem:[#allocation2 + $0x1e0] sm:$0xff]
    %v339 = vld [vmem:[#allocation2 + $0x1e8] sm:$0xff]
    %v340 = vld [vmem:[#allocation2 + $0x1f0] sm:$0xff]
    %v341 = vld [vmem:[#allocation2 + $0x1f8] sm:$0xff]
    %v342 = vld [vmem:[#allocation2 + $0x200] sm:$0xff]
    %v343 = vld [vmem:[#allocation2 + $0x208] sm:$0xff]
    %v344 = vld [vmem:[#allocation2 + $0x210] sm:$0xff]
    %v345 = vld [vmem:[#allocation2 + $0x218] sm:$0xff]
    %v346 = vld [vmem:[#allocation2 + $0x220] sm:$0xff]
    %v347 = vld [vmem:[#allocation2 + $0x228] sm:$0xff]
    %v348 = vld [vmem:[#allocation2 + $0x230] sm:$0xff]
    %v349 = vld [vmem:[#allocation2 + $0x238] sm:$0xff]
    %v350 = vld [vmem:[#allocation2 + $0x240] sm:$0xff]
    %v351 = vld [vmem:[#allocation2 + $0x248] sm:$0xff]
    %352 = vmatprep.subr.mxu0 0.0
    %353 = vmatpush1.msra.mxu0 %v335
    %354 = vmatprep.subr.mxu0 0.0
    %355 = vmatpush1.msra.mxu0 %v336
    %356 = vmatprep.subr.mxu0 0.0
    %357 = vmatpush1.msra.mxu0 %v337
    %358 = vmatprep.subr.mxu0 0.0
    %359 = vmatpush1.msra.mxu0 %v338
    %360 = vmatprep.subr.mxu0 0.0
    %361 = vmatpush1.msra.mxu0 %v339
    %362 = vmatprep.subr.mxu0 0.0
    %363 = vmatpush1.msra.mxu0 %v340
    %364 = vmatprep.subr.mxu0 0.0
    %365 = vmatpush1.msra.mxu0 %v341
    %366 = vmatprep.subr.mxu0 0.0
    %367 = vmatpush1.msra.mxu0 %v342
    %368 = vmatprep.subr.mxu0 0.0
    %369 = vmatpush1.msra.mxu0 %v343
    %370 = vmatprep.subr.mxu0 0.0
    %371 = vmatpush1.msra.mxu0 %v344
    %372 = vmatprep.subr.mxu0 0.0
    %373 = vmatpush1.msra.mxu0 %v345
    %374 = vmatprep.subr.mxu0 0.0
    %375 = vmatpush1.msra.mxu0 %v346
    %376 = vmatprep.subr.mxu0 0.0
    %377 = vmatpush1.msra.mxu0 %v347
    %378 = vmatprep.subr.mxu0 0.0
    %379 = vmatpush1.msra.mxu0 %v348
    %380 = vmatprep.subr.mxu0 0.0
    %381 = vmatpush1.msra.mxu0 %v349
    %382 = vmatprep.subr.mxu0 0.0
    %383 = vmatpush1.msra.mxu0 %v350
    %384 = vmatprep.subr.mxu0 0.0
    %385 = vmatpush1.msra.mxu0 0.0
    %386 = vmatprep.subr.mxu0 0.0
    %387 = vmatpush1.msra.mxu0 0.0
    %388 = vmatprep.subr.mxu0 0.0
    %389 = vmatpush1.msra.mxu0 0.0
    %390 = vmatprep.subr.mxu0 0.0
    %391 = vmatpush1.msra.mxu0 0.0
    %392 = vmatprep.subr.mxu0 0.0
    %393 = vmatpush1.msra.mxu0 0.0
    %394 = vmatprep.subr.mxu0 0.0
    %395 = vmatpush1.msra.mxu0 0.0
    %396 = vmatprep.subr.mxu0 0.0
    %397 = vmatpush1.msra.mxu0 0.0
    %398 = vmatprep.subr.mxu0 0.0
    %399 = vmatpush1.msra.mxu0 0.0
    %400 = vmatprep.subr.mxu0 0.0
    %401 = vmatpush1.msra.mxu0 0.0
    %402 = vmatprep.subr.mxu0 0.0
    %403 = vmatpush1.msra.mxu0 0.0
    %404 = vmatprep.subr.mxu0 0.0
    %405 = vmatpush1.msra.mxu0 0.0
    %406 = vmatprep.subr.mxu0 0.0
    %407 = vmatpush1.msra.mxu0 0.0
    %408 = vmatprep.subr.mxu0 0.0
    %409 = vmatpush1.msra.mxu0 0.0
    %410 = vmatprep.subr.mxu0 0.0
    %411 = vmatpush1.msra.mxu0 0.0
    %412 = vmatprep.subr.mxu0 0.0
    %413 = vmatpush1.msra.mxu0 0.0
    %414 = vmatprep.subr.mxu0 0.0
    %415 = vmatpush1.msra.mxu0 0.0
    %416 = vmatprep.mubr.f32.mxu0 0.0
    %417 = vmatmul.mubr.f32.gmra.mrb[0].mxu0 %v334
    %v418 = vpop.f32.mrb[0].mxu0
    %v419 = vadd.f32 %v351, %v418
    %v420 = vpop.f32.mrb[0].mxu0
    %421 = vdwg.mxu0
    %v422 = vmax.f32 %v419, 0.0
    %v423 = vld [vmem:[#allocation2 + $0x250] sm:$0xff]
    %v424 = vld [vmem:[#allocation2 + $0x258] sm:$0xff]
    %v425 = vld [vmem:[#allocation2 + $0x260] sm:$0xff]
    %v426 = vld [vmem:[#allocation2 + $0x268] sm:$0xff]
    %v427 = vld [vmem:[#allocation2 + $0x270] sm:$0xff]
    %v428 = vld [vmem:[#allocation2 + $0x278] sm:$0xff]
    %v429 = vld [vmem:[#allocation2 + $0x280] sm:$0xff]
    %v430 = vld [vmem:[#allocation2 + $0x288] sm:$0xff]
    %v431 = vld [vmem:[#allocation2 + $0x290] sm:$0xff]
    %v432 = vld [vmem:[#allocation2 + $0x298] sm:$0xff]
    %v433 = vld [vmem:[#allocation2 + $0x2a0] sm:$0xff]
    %v434 = vld [vmem:[#allocation2 + $0x2a8] sm:$0xff]
    %v435 = vld [vmem:[#allocation2 + $0x2b0] sm:$0xff]
    %v436 = vld [vmem:[#allocation2 + $0x2b8] sm:$0xff]
    %v437 = vld [vmem:[#allocation2 + $0x2c0] sm:$0xff]
    %v438 = vld [vmem:[#allocation2 + $0x2c8] sm:$0xff]
    %v439 = vld [vmem:[#allocation2 + $0x2d0] sm:$0xff]
    %440 = vmatprep.subr.mxu0 0.0
    %441 = vmatpush1.msra.mxu0 %v423
    %442 = vmatprep.subr.mxu0 0.0
    %443 = vmatpush1.msra.mxu0 %v424
    %444 = vmatprep.subr.mxu0 0.0
    %445 = vmatpush1.msra.mxu0 %v425
    %446 = vmatprep.subr.mxu0 0.0
    %447 = vmatpush1.msra.mxu0 %v426
    %448 = vmatprep.subr.mxu0 0.0
    %449 = vmatpush1.msra.mxu0 %v427
    %450 = vmatprep.subr.mxu0 0.0
    %451 = vmatpush1.msra.mxu0 %v428
    %452 = vmatprep.subr.mxu0 0.0
    %453 = vmatpush1.msra.mxu0 %v429
    %454 = vmatprep.subr.mxu0 0.0
    %455 = vmatpush1.msra.mxu0 %v430
    %456 = vmatprep.subr.mxu0 0.0
    %457 = vmatpush1.msra.mxu0 %v431
    %458 = vmatprep.subr.mxu0 0.0
    %459 = vmatpush1.msra.mxu0 %v432
    %460 = vmatprep.subr.mxu0 0.0
    %461 = vmatpush1.msra.mxu0 %v433
    %462 = vmatprep.subr.mxu0 0.0
    %463 = vmatpush1.msra.mxu0 %v434
    %464 = vmatprep.subr.mxu0 0.0
    %465 = vmatpush1.msra.mxu0 %v435
    %466 = vmatprep.subr.mxu0 0.0
    %467 = vmatpush1.msra.mxu0 %v436
    %468 = vmatprep.subr.mxu0 0.0
    %469 = vmatpush1.msra.mxu0 %v437
    %470 = vmatprep.subr.mxu0 0.0
    %471 = vmatpush1.msra.mxu0 %v438
    %472 = vmatprep.subr.mxu0 0.0
    %473 = vmatpush1.msra.mxu0 0.0
    %474 = vmatprep.subr.mxu0 0.0
    %475 = vmatpush1.msra.mxu0 0.0
    %476 = vmatprep.subr.mxu0 0.0
    %477 = vmatpush1.msra.mxu0 0.0
    %478 = vmatprep.subr.mxu0 0.0
    %479 = vmatpush1.msra.mxu0 0.0
    %480 = vmatprep.subr.mxu0 0.0
    %481 = vmatpush1.msra.mxu0 0.0
    %482 = vmatprep.subr.mxu0 0.0
    %483 = vmatpush1.msra.mxu0 0.0
    %484 = vmatprep.subr.mxu0 0.0
    %485 = vmatpush1.msra.mxu0 0.0
    %486 = vmatprep.subr.mxu0 0.0
    %487 = vmatpush1.msra.mxu0 0.0
    %488 = vmatprep.subr.mxu0 0.0
    %489 = vmatpush1.msra.mxu0 0.0
    %490 = vmatprep.subr.mxu0 0.0
    %491 = vmatpush1.msra.mxu0 0.0
    %492 = vmatprep.subr.mxu0 0.0
    %493 = vmatpush1.msra.mxu0 0.0
    %494 = vmatprep.subr.mxu0 0.0
    %495 = vmatpush1.msra.mxu0 0.0
    %496 = vmatprep.subr.mxu0 0.0
    %497 = vmatpush1.msra.mxu0 0.0
    %498 = vmatprep.subr.mxu0 0.0
    %499 = vmatpush1.msra.mxu0 0.0
    %500 = vmatprep.subr.mxu0 0.0
    %501 = vmatpush1.msra.mxu0 0.0
    %502 = vmatprep.subr.mxu0 0.0
    %503 = vmatpush1.msra.mxu0 0.0
    %504 = vmatprep.mubr.f32.mxu0 0.0
    %505 = vmatmul.mubr.f32.gmra.mrb[0].mxu0 %v422
    %v506 = vpop.f32.mrb[0].mxu0
    %v507 = vadd.f32 %v439, %v506
    %v508 = vpop.f32.mrb[0].mxu0
    %509 = vdwg.mxu0
    %v510 = vadd.f32 %v507, %v127
    %511 = vst [vmem:[%s2] sm:$0xff] %v510
    // Predicated region
    $region14: #{vae_forward.1} parent=1 // pred_check
      _
    $region15: #{vae_forward.1} parent=1 // pred_check_branch
      %513 = sbr.rel (0) target = $region17
    $region16: #{vae_forward.1} parent=1 // pred_region
      _
    $region17: #{vae_forward.1} parent=1 // pred_fallthru
      _
    // Predicated region
    $region18: #{vae_forward.1} parent=1 // pred_check
      _
    $region19: #{vae_forward.1} parent=1 // pred_check_branch
      %515 = sbr.rel (0) target = $region21
    $region20: #{vae_forward.1} parent=1 // pred_region
      _
    $region21: #{vae_forward.1} parent=1 // pred_fallthru
      _
    %516 = vsyncpa [#allocation3], 1

</llo_original>
